<compile_context>
chip_gen: v7x
topology: tpu7x:2x2x1
jax: 0.10.0
libtpu: 0.0.40
codegen_flags: <defaults>
</compile_context>

<pallas_src>
import jax
import jax.numpy as jnp
from jax import lax
from jax.experimental import pallas as pl
from jax.experimental.pallas import tpu as pltpu

BN_EPS = 1e-5
_NEG_PAD = -1e30          # bias for padded logit columns -> exp() underflows to 0


def _round_up(x, m):
    return ((x + m - 1) // m) * m


def _pad2d(a, rows, cols, value=0.0):
    pr, pc = rows - a.shape[0], cols - a.shape[1]
    if pr == 0 and pc == 0:
        return a
    return jnp.pad(a, ((0, pr), (0, pc)), constant_values=value)


def _vmem_limit_bytes():
    """Generation-aware scoped-VMEM limit (leaves headroom on every chip)."""
    try:
        cap = getattr(pltpu.get_tpu_info(), "vmem_capacity_bytes", None)
        if cap:
            return min(int(cap * 0.75), 112 << 20)
    except Exception:
        pass
    return 48 << 20        # safe even on v7x's 64 MiB / TC


# ---------------------------------------------------------------------------
# Stage 1:  T = V_La[:, None] * (U.T @ X)
#   grid = (j over T rows [parallel], k over the contraction rows [arbitrary])
#   f32 VMEM accumulator; output written once, already in compute_dtype.
# ---------------------------------------------------------------------------
def _ut_x_kernel(u_ref, x_ref, vla_ref, t_ref, acc_ref):
    k = pl.program_id(1)

    @pl.when(k == 0)
    def _():
        acc_ref[...] = jnp.zeros_like(acc_ref)

    # U_tile.T @ X_tile without materializing a transpose: contract dim 0 of both.
    acc_ref[...] += lax.dot_general(
        u_ref[...], x_ref[...],
        dimension_numbers=(((0,), (0,)), ((), ())),
        preferred_element_type=jnp.float32)

    @pl.when(k == pl.num_programs(1) - 1)
    def _():
        # fold diag(V_La) here (one multiply per output element, once)
        t_ref[...] = (acc_ref[...] * vla_ref[...]).astype(t_ref.dtype)


# ---------------------------------------------------------------------------
# Stage 2 (per row tile): M = U_i @ T ; H0 = M@W + b (hidden_emd);
#                         log_softmax(relu(H0*scale + shift) @ MLP + mlp_b)
# ---------------------------------------------------------------------------
def _row_kernel(u_ref, t_ref, w_ref, wb_ref, sc_ref, sh_ref,
                mw_ref, mb_ref, out_ref, hid_ref):
    cdt = u_ref.dtype

    m = jnp.dot(u_ref[...], t_ref[...], preferred_element_type=jnp.float32)

    h0 = jnp.dot(m.astype(cdt), w_ref[...],
                 preferred_element_type=jnp.float32) + wb_ref[...]
    hid_ref[...] = h0.astype(hid_ref.dtype)          # hidden_emd (pre-BN)

    # folded eval BatchNorm + ReLU (+ dropout == identity at inference)
    h = jnp.maximum(h0 * sc_ref[...] + sh_ref[...], 0.0)

    logits = jnp.dot(h.astype(cdt), mw_ref[...],
                     preferred_element_type=jnp.float32) + mb_ref[...]

    # log_softmax along dim=1 (padded classes sit at ~-1e30 -> contribute 0)
    mx = jnp.max(logits, axis=1, keepdims=True)
    lse = jnp.log(jnp.sum(jnp.exp(logits - mx), axis=1, keepdims=True)) + mx
    out_ref[...] = (logits - lse).astype(out_ref.dtype)


# ---------------------------------------------------------------------------
# Small-graph fast path: everything fused in a single grid-less pallas_call.
# ---------------------------------------------------------------------------
def _fused_kernel(u_ref, x_ref, vla_ref, w_ref, wb_ref, sc_ref, sh_ref,
                  mw_ref, mb_ref, out_ref, hid_ref):
    cdt = u_ref.dtype

    t = lax.dot_general(u_ref[...], x_ref[...],
                        dimension_numbers=(((0,), (0,)), ((), ())),
                        preferred_element_type=jnp.float32)
    tv = (t * vla_ref[...]).astype(cdt)               # diag(V_La) folded into T
    m = jnp.dot(u_ref[...], tv, preferred_element_type=jnp.float32)

    h0 = jnp.dot(m.astype(cdt), w_ref[...],
                 preferred_element_type=jnp.float32) + wb_ref[...]
    hid_ref[...] = h0.astype(hid_ref.dtype)

    h = jnp.maximum(h0 * sc_ref[...] + sh_ref[...], 0.0)
    logits = jnp.dot(h.astype(cdt), mw_ref[...],
                     preferred_element_type=jnp.float32) + mb_ref[...]

    mx = jnp.max(logits, axis=1, keepdims=True)
    lse = jnp.log(jnp.sum(jnp.exp(logits - mx), axis=1, keepdims=True)) + mx
    out_ref[...] = (logits - lse).astype(out_ref.dtype)


def slog_wo_s2_forward(X, La, U, params, *, compute_dtype=jnp.bfloat16,
                       row_block=None, fuse=None):
    N, C_in = X.shape
    Hd = params["w"].shape[1]
    C_out = params["mlp_w"].shape[1]
    cdt = jnp.dtype(compute_dtype)
    cbytes = cdt.itemsize

    vmem_limit = _vmem_limit_bytes()
    if row_block is None:
        row_block = 512 if vmem_limit >= (80 << 20) else 256

    # --- host-side prep (hoisted out of the kernels) -------------------------
    v_la = jnp.power(La.astype(jnp.float32), params["ve"][0, 0])   # Velocity(7)
    bn_scale = params["bn_gamma"] * lax.rsqrt(params["bn_rv"] + BN_EPS)
    bn_shift = params["bn_beta"] - params["bn_rm"] * bn_scale

    # --- lane-dense padding targets ------------------------------------------
    Cip = _round_up(C_in, 128)
    Hp = _round_up(Hd, 128)
    Cop = _round_up(C_out, 128)

    def _padded_operands(Np):
        return (
            _pad2d(U.astype(jnp.float32), Np, Np).astype(cdt),            # U
            _pad2d(X.astype(jnp.float32), Np, Cip).astype(cdt),           # X
            _pad2d(v_la.reshape(-1, 1), Np, 1),                           # V_La col (f32)
            _pad2d(params["w"].astype(jnp.float32), Cip, Hp).astype(cdt), # W
            _pad2d(params["w_b"].astype(jnp.float32), 1, Hp),             # W bias (f32)
            _pad2d(bn_scale, 1, Hp),                                      # padded cols -> 0
            _pad2d(bn_shift, 1, Hp),
            _pad2d(params["mlp_w"].astype(jnp.float32), Hp, Cop).astype(cdt),
            _pad2d(params["mlp_b"].astype(jnp.float32), 1, Cop, value=_NEG_PAD),
        )

    # --- small-graph fused fast path ------------------------------------------
    Np_min = _round_up(N, 8)
    fused_bytes = (Np_min * Np_min * cbytes
                   + Np_min * Cip * (2 * cbytes + 8)
                   + Np_min * (Hp + Cop) * 8
                   + (Cip * Hp + Hp * Cop) * cbytes
                   + (Hp + Cop) * 16)
    if fuse is None:
        fuse = fused_bytes <= max(vmem_limit // 3, 16 << 20)

    if fuse:
        Np = Np_min
        Up, Xp, vlap, Wp, wbp, scp, shp, Mwp, Mbp = _padded_operands(Np)
        out_p, hid_p = pl.pallas_call(
            _fused_kernel,
            out_shape=(jax.ShapeDtypeStruct((Np, Cop), jnp.float32),
                       jax.ShapeDtypeStruct((Np, Hp), cdt)),
            compiler_params=pltpu.CompilerParams(vmem_limit_bytes=vmem_limit),
        )(Up, Xp, vlap, Wp, wbp, scp, shp, Mwp, Mbp)
        return out_p[:N, :C_out], hid_p[:N, :Hd]

    # --- tiled two-stage path --------------------------------------------------
    # shrink tm until stage-2's dominant buffers fit the scoped limit
    tm = max(128, row_block)
    Np_est = _round_up(N, 128)
    resident = (Np_est * Cip + Cip * Hp + Hp * Cop) * cbytes
    budget = int(vmem_limit * 0.55)
    while tm > 128 and 2 * tm * Np_est * cbytes + resident > budget:
        tm //= 2
    Np = _round_up(N, tm)
    n_tiles = Np // tm

    Up, Xp, vlap, Wp, wbp, scp, shp, Mwp, Mbp = _padded_operands(Np)

    # Stage 1: T = V_La[:,None] * (U.T @ X)   (2-D grid, f32 scratch accumulator)
    Tv = pl.pallas_call(
        _ut_x_kernel,
        out_shape=jax.ShapeDtypeStruct((Np, Cip), cdt),
        grid_spec=pltpu.PrefetchScalarGridSpec(
            num_scalar_prefetch=0,
            grid=(n_tiles, n_tiles),
            in_specs=[pl.BlockSpec((tm, tm), lambda j, k: (k, j)),    # U block
                      pl.BlockSpec((tm, Cip), lambda j, k: (k, 0)),   # X block
                      pl.BlockSpec((tm, 1), lambda j, k: (j, 0))],    # V_La column
            out_specs=pl.BlockSpec((tm, Cip), lambda j, k: (j, 0)),
            scratch_shapes=[pltpu.VMEM((tm, Cip), jnp.float32)]),
        compiler_params=pltpu.CompilerParams(
            dimension_semantics=("parallel", "arbitrary"),
            vmem_limit_bytes=vmem_limit),
    )(Up, Xp, vlap)

    # Stage 2: row-tiled  M = U @ T ; Linear / BN / ReLU / MLP / log_softmax
    def _stage2_call(single_buffer):
        kw = dict(pipeline_mode=pl.Buffered(1)) if single_buffer else {}
        in_specs = [
            pl.BlockSpec((tm, Np), lambda i: (i, 0)),             # U row tile
            pl.BlockSpec((Np, Cip), lambda i: (0, 0), **kw),      # T (grid-invariant)
            pl.BlockSpec((Cip, Hp), lambda i: (0, 0), **kw),      # W
            pl.BlockSpec((1, Hp), lambda i: (0, 0)),              # W bias
            pl.BlockSpec((1, Hp), lambda i: (0, 0)),              # BN scale
            pl.BlockSpec((1, Hp), lambda i: (0, 0)),              # BN shift
            pl.BlockSpec((Hp, Cop), lambda i: (0, 0), **kw),      # MLP W
            pl.BlockSpec((1, Cop), lambda i: (0, 0)),             # MLP bias
        ]
        return pl.pallas_call(
            _row_kernel,
            out_shape=(jax.ShapeDtypeStruct((Np, Cop), jnp.float32),
                       jax.ShapeDtypeStruct((Np, Hp), cdt)),
            grid_spec=pltpu.PrefetchScalarGridSpec(
                num_scalar_prefetch=0,
                grid=(n_tiles,),
                in_specs=in_specs,
                out_specs=(pl.BlockSpec((tm, Cop), lambda i: (i, 0)),
                           pl.BlockSpec((tm, Hp), lambda i: (i, 0)))),
            compiler_params=pltpu.CompilerParams(
                dimension_semantics=("parallel",),
                vmem_limit_bytes=vmem_limit),
        )(Up, Tv, Wp, wbp, scp, shp, Mwp, Mbp)

    try:
        out_p, hid_p = _stage2_call(True)     # single-buffer grid-invariant operands
    except Exception:
        out_p, hid_p = _stage2_call(False)    # fallback: default double-buffering

    return out_p[:N, :C_out], hid_p[:N, :Hd]


def init_params(key, in_channels, hidden_dim, out_channels):
    k1, k2, k3, k4 = jax.random.split(key, 4)
    return {
        "ve": jnp.full((1, 1), 7.0, dtype=jnp.float32),
        "w": (jax.random.normal(k1, (in_channels, hidden_dim), jnp.float32)
              * (1.0 / jnp.sqrt(in_channels))),
        "w_b": (jax.random.normal(k2, (1, hidden_dim), jnp.float32)
                * (1.0 / jnp.sqrt(in_channels))),
        "bn_gamma": jnp.ones((1, hidden_dim), jnp.float32),
        "bn_beta": jnp.zeros((1, hidden_dim), jnp.float32),
        "bn_rm": jnp.zeros((1, hidden_dim), jnp.float32),
        "bn_rv": jnp.ones((1, hidden_dim), jnp.float32),
        "mlp_w": (jax.random.normal(k3, (hidden_dim, out_channels), jnp.float32)
                  * (1.0 / jnp.sqrt(hidden_dim))),
        "mlp_b": (jax.random.normal(k4, (1, out_channels), jnp.float32)
                  * (1.0 / jnp.sqrt(hidden_dim))),
    }


def reference_forward(X, La, U, params):
    """Pure-JAX f32 reference mirroring the PyTorch module."""
    v_la = jnp.power(La, params["ve"][0, 0])
    A = (U * v_la[None, :]) @ U.T
    M = A @ X
    H0 = M @ params["w"] + params["w_b"]
    hbn = (H0 - params["bn_rm"]) / jnp.sqrt(params["bn_rv"] + BN_EPS) \
        * params["bn_gamma"] + params["bn_beta"]
    hrelu = jnp.maximum(hbn, 0.0)
    logits = hrelu @ params["mlp_w"] + params["mlp_b"]
    return jax.nn.log_softmax(logits, axis=1), H0


if __name__ == "__main__":
    key = jax.random.PRNGKey(0)

    # --- Case 1: small graph (fused fast path), f32 tight check ----------------
    N, C_in, Hd, C_out = 8, 4, 32, 4
    kx, kla, ku, kp, key = jax.random.split(key, 5)
    X = jax.random.normal(kx, (N, C_in), jnp.float32)
    La = jax.random.uniform(kla, (N,), jnp.float32, minval=0.1, maxval=1.9)
    U = jax.random.normal(ku, (N, N), jnp.float32) * (1.0 / jnp.sqrt(N))
    params = init_params(kp, C_in, Hd, C_out)

    lp, hid = slog_wo_s2_forward(X, La, U, params, compute_dtype=jnp.float32)
    jax.block_until_ready((lp, hid))
    ref_lp, ref_h = reference_forward(X, La, U, params)
    assert lp.shape == (N, C_out) and hid.shape == (N, Hd)
    assert jnp.allclose(lp, ref_lp, atol=1e-4, rtol=1e-4)
    assert jnp.allclose(hid, ref_h, atol=1e-4, rtol=1e-4)

    # default bf16 path (same inputs): sanity checks only (lower precision)
    lp16, hid16 = slog_wo_s2_forward(X, La, U, params)
    jax.block_until_ready((lp16, hid16))
    assert bool(jnp.all(jnp.isfinite(lp16))) and bool(jnp.all(jnp.isfinite(hid16)))
    assert jnp.allclose(jnp.sum(jnp.exp(lp16), axis=1), 1.0, atol=1e-3)

    # --- Case 2: larger graph, forced two-stage tiled path, f32 check ----------
    N2, C_in2, Hd2, C_out2 = 384, 4, 32, 4
    kx, kla, ku, kp, key = jax.random.split(key, 5)
    X2 = jax.random.normal(kx, (N2, C_in2), jnp.float32)
    La2 = jax.random.uniform(kla, (N2,), jnp.float32, minval=0.1, maxval=1.2)
    U2 = jax.random.normal(ku, (N2, N2), jnp.float32) * (1.0 / jnp.sqrt(N2))
    params2 = init_params(kp, C_in2, Hd2, C_out2)

    lp2, hid2 = slog_wo_s2_forward(X2, La2, U2, params2,
                                   compute_dtype=jnp.float32,
                                   row_block=128, fuse=False)
    jax.block_until_ready((lp2, hid2))
    ref_lp2, ref_h2 = reference_forward(X2, La2, U2, params2)
    assert lp2.shape == (N2, C_out2) and hid2.shape == (N2, Hd2)
    assert jnp.allclose(lp2, ref_lp2, atol=2e-3, rtol=2e-3)
    assert jnp.allclose(hid2, ref_h2, atol=2e-3, rtol=2e-3)

    # default bf16 tiled path: sanity only
    lp2b, hid2b = slog_wo_s2_forward(X2, La2, U2, params2, fuse=False)
    jax.block_until_ready((lp2b, hid2b))
    assert bool(jnp.all(jnp.isfinite(lp2b))) and bool(jnp.all(jnp.isfinite(hid2b)))
    assert jnp.allclose(jnp.sum(jnp.exp(lp2b), axis=1), 1.0, atol=1e-3)

    print("KERNEL_OK")
</pallas_src>

<mosaic_0001>
module attributes {stable_mosaic.version = 11 : i64} {
  func.func @_fused_kernel(%arg0: memref<8x8xf32, #tpu.memory_space<vmem>>, %arg1: memref<8x128xf32, #tpu.memory_space<vmem>>, %arg2: memref<8x1xf32, #tpu.memory_space<vmem>>, %arg3: memref<128x128xf32, #tpu.memory_space<vmem>>, %arg4: memref<1x128xf32, #tpu.memory_space<vmem>>, %arg5: memref<1x128xf32, #tpu.memory_space<vmem>>, %arg6: memref<1x128xf32, #tpu.memory_space<vmem>>, %arg7: memref<128x128xf32, #tpu.memory_space<vmem>>, %arg8: memref<1x128xf32, #tpu.memory_space<vmem>>, %arg9: memref<8x128xf32, #tpu.memory_space<vmem>>, %arg10: memref<8x128xf32, #tpu.memory_space<vmem>>) attributes {dimension_semantics = [], scalar_prefetch = 0 : i64, scratch_operands = 0 : i64, tpu.core_type = #tpu.core_type<tc>} {
    %c0 = arith.constant 0 : index
    %c0_0 = arith.constant 0 : index
    %0 = vector.load %arg0[%c0, %c0_0] : memref<8x8xf32, #tpu.memory_space<vmem>>, vector<8x8xf32>
    %c0_1 = arith.constant 0 : index
    %c0_2 = arith.constant 0 : index
    %1 = vector.load %arg1[%c0_1, %c0_2] : memref<8x128xf32, #tpu.memory_space<vmem>>, vector<8x128xf32>
    %cst = arith.constant dense<0.000000e+00> : vector<8x128xf32>
    %2 = tpu.matmul %0, %1, %cst {dimension_numbers = #tpu.dot_dimension_numbers<[0], [0], [1], [1], [0, 1, 1, 1], [], []>} : vector<8x8xf32>, vector<8x128xf32>, vector<8x128xf32> -> vector<8x128xf32>
    %c0_3 = arith.constant 0 : index
    %c0_4 = arith.constant 0 : index
    %3 = vector.load %arg2[%c0_3, %c0_4] : memref<8x1xf32, #tpu.memory_space<vmem>>, vector<8x1xf32>
    %4 = vector.broadcast %3 : vector<8x1xf32> to vector<8x128xf32>
    %5 = arith.mulf %2, %4 : vector<8x128xf32>
    %c0_5 = arith.constant 0 : index
    %c0_6 = arith.constant 0 : index
    %6 = vector.load %arg0[%c0_5, %c0_6] : memref<8x8xf32, #tpu.memory_space<vmem>>, vector<8x8xf32>
    %cst_7 = arith.constant dense<0.000000e+00> : vector<8x128xf32>
    %7 = tpu.matmul %6, %5, %cst_7 {dimension_numbers = #tpu.dot_dimension_numbers<[1], [0], [0], [1], [0, 0, 1, 1], [], []>} : vector<8x8xf32>, vector<8x128xf32>, vector<8x128xf32> -> vector<8x128xf32>
    %c0_8 = arith.constant 0 : index
    %c0_9 = arith.constant 0 : index
    %8 = vector.load %arg3[%c0_8, %c0_9] : memref<128x128xf32, #tpu.memory_space<vmem>>, vector<128x128xf32>
    %cst_10 = arith.constant dense<0.000000e+00> : vector<8x128xf32>
    %9 = tpu.matmul %7, %8, %cst_10 {dimension_numbers = #tpu.dot_dimension_numbers<[1], [0], [0], [1], [0, 0, 1, 1], [], []>} : vector<8x128xf32>, vector<128x128xf32>, vector<8x128xf32> -> vector<8x128xf32>
    %c0_11 = arith.constant 0 : index
    %c0_12 = arith.constant 0 : index
    %10 = vector.load %arg4[%c0_11, %c0_12] : memref<1x128xf32, #tpu.memory_space<vmem>>, vector<1x128xf32>
    %11 = vector.broadcast %10 : vector<1x128xf32> to vector<8x128xf32>
    %12 = arith.addf %9, %11 : vector<8x128xf32>
    %c0_13 = arith.constant 0 : index
    %c0_14 = arith.constant 0 : index
    %13 = vector.load %arg10[%c0_13, %c0_14] : memref<8x128xf32, #tpu.memory_space<vmem>>, vector<8x128xf32>
    tpu.vector_store %arg10[%c0_13, %c0_14], %12 {strides = array<i32>} : memref<8x128xf32, #tpu.memory_space<vmem>>, vector<8x128xf32>,
    %c0_15 = arith.constant 0 : index
    %c0_16 = arith.constant 0 : index
    %14 = vector.load %arg5[%c0_15, %c0_16] : memref<1x128xf32, #tpu.memory_space<vmem>>, vector<1x128xf32>
    %15 = vector.broadcast %14 : vector<1x128xf32> to vector<8x128xf32>
    %16 = arith.mulf %12, %15 : vector<8x128xf32>
    %c0_17 = arith.constant 0 : index
    %c0_18 = arith.constant 0 : index
    %17 = vector.load %arg6[%c0_17, %c0_18] : memref<1x128xf32, #tpu.memory_space<vmem>>, vector<1x128xf32>
    %18 = vector.broadcast %17 : vector<1x128xf32> to vector<8x128xf32>
    %19 = arith.addf %16, %18 : vector<8x128xf32>
    %cst_19 = arith.constant 0.000000e+00 : f32
    %20 = vector.broadcast %cst_19 : f32 to vector<8x128xf32>
    %21 = arith.maximumf %19, %20 : vector<8x128xf32>
    %c0_20 = arith.constant 0 : index
    %c0_21 = arith.constant 0 : index
    %22 = vector.load %arg7[%c0_20, %c0_21] : memref<128x128xf32, #tpu.memory_space<vmem>>, vector<128x128xf32>
    %cst_22 = arith.constant dense<0.000000e+00> : vector<8x128xf32>
    %23 = tpu.matmul %21, %22, %cst_22 {dimension_numbers = #tpu.dot_dimension_numbers<[1], [0], [0], [1], [0, 0, 1, 1], [], []>} : vector<8x128xf32>, vector<128x128xf32>, vector<8x128xf32> -> vector<8x128xf32>
    %c0_23 = arith.constant 0 : index
    %c0_24 = arith.constant 0 : index
    %24 = vector.load %arg8[%c0_23, %c0_24] : memref<1x128xf32, #tpu.memory_space<vmem>>, vector<1x128xf32>
    %25 = vector.broadcast %24 : vector<1x128xf32> to vector<8x128xf32>
    %26 = arith.addf %23, %25 : vector<8x128xf32>
    %cst_25 = arith.constant dense<0xFF800000> : vector<8xf32>
    %27 = vector.multi_reduction <maximumf>, %26, %cst_25 [1] : vector<8x128xf32> to vector<8xf32>
    %28 = vector.shape_cast %27 : vector<8xf32> to vector<8x1xf32>
    %29 = vector.broadcast %28 : vector<8x1xf32> to vector<8x128xf32>
    %30 = arith.subf %26, %29 : vector<8x128xf32>
    %31 = math.exp %30 : vector<8x128xf32>
    %cst_26 = arith.constant dense<0.000000e+00> : vector<8xf32>
    %32 = vector.multi_reduction <add>, %31, %cst_26 [1] : vector<8x128xf32> to vector<8xf32>
    %33 = vector.shape_cast %32 : vector<8xf32> to vector<8x1xf32>
    %34 = math.log %33 : vector<8x1xf32>
    %35 = arith.addf %34, %28 : vector<8x1xf32>
    %36 = vector.broadcast %35 : vector<8x1xf32> to vector<8x128xf32>
    %37 = arith.subf %26, %36 : vector<8x128xf32>
    %c0_27 = arith.constant 0 : index
    %c0_28 = arith.constant 0 : index
    %38 = vector.load %arg9[%c0_27, %c0_28] : memref<8x128xf32, #tpu.memory_space<vmem>>, vector<8x128xf32>
    tpu.vector_store %arg9[%c0_27, %c0_28], %37 {strides = array<i32>} : memref<8x128xf32, #tpu.memory_space<vmem>>, vector<8x128xf32>,
    return
  }
}

</mosaic_0001>

<llo_original>
// kernel: tpu_custom_call.1
$region0: #{tpu_custom_call.1}
  #allocation0 [shape = 'u32[]', space=smem, size = 0x4, offset = 0x4, fixed_abs, tag = 'smem constant byte address 0x4 - core index']
  #allocation1 [shape = 'u32[144,128]{1,0:T(1,128)}', space=vmem, size = 0x12000, scoped, tag = 'internal scratch']
  %s0 = inlined_call_operand.vmem [shape: f32[8,8], index: 0, kind: input, shape index: {}]
  %s1 = inlined_call_operand.hbm [shape: f32[8,128], index: 1, kind: input, shape index: {}]
  %s2 = inlined_call_operand.vmem [shape: f32[8,1], index: 2, kind: input, shape index: {}]
  %s3 = inlined_call_operand.hbm [shape: f32[128,128], index: 3, kind: input, shape index: {}]
  %s4 = inlined_call_operand.vmem [shape: f32[1,128], index: 4, kind: input, shape index: {}]
  %s5 = inlined_call_operand.vmem [shape: f32[1,128], index: 5, kind: input, shape index: {}]
  %s6 = inlined_call_operand.vmem [shape: f32[1,128], index: 6, kind: input, shape index: {}]
  %s7 = inlined_call_operand.hbm [shape: f32[128,128], index: 7, kind: input, shape index: {}]
  %s8 = inlined_call_operand.vmem [shape: f32[1,128], index: 8, kind: input, shape index: {}]
  %s9 = inlined_call_operand.hbm [shape: f32[8,128], index: 9, kind: output, shape index: {0}]
  %s10 = inlined_call_operand.hbm [shape: f32[8,128], index: 10, kind: output, shape index: {1}]
  %11 = xla_tuple %s9, %s10
  %s12 = sld [smem:[#allocation0]]
  $region66: #{tpu_custom_call.1} parent=0
    _
  %s14 = ssub.s32 1, %s12
  %s15 = scalar_select 0, %s14, %s12
  $region1: #{tpu_custom_call.1} parent=0
    #allocation2 [shape = 'u8[4096]{0}', space=vmem, size = 0x1000, scoped, tag = 'input window, operand 1, single buffered']
    #allocation3 [shape = 's32[1]{0}', space=sflag, size = 0x4, scoped, tag = 'scoped memory for tpu_custom_call.1']
    #allocation4 [shape = 's32[1]{0}', space=sflag, size = 0x4, scoped, tag = 'scoped memory for tpu_custom_call.1']
    #allocation5 [shape = 'u8[65536]{0}', space=vmem, size = 0x10000, scoped, tag = 'input window, operand 3, single buffered']
    #allocation6 [shape = 's32[1]{0}', space=sflag, size = 0x4, scoped, tag = 'scoped memory for tpu_custom_call.1']
    #allocation7 [shape = 'u8[65536]{0}', space=vmem, size = 0x10000, scoped, tag = 'input window, operand 7, single buffered']
    #allocation8 [shape = 'u8[4096]{0}', space=vmem, size = 0x1000, scoped, tag = 'output window, operand 0, single buffered']
    #allocation9 [shape = 'u8[4096]{0}', space=vmem, size = 0x1000, scoped, tag = 'output window, operand 1, single buffered']
    #allocation10 [shape = 's32[1]{0}', space=sflag, size = 0x4, scoped, tag = 'scoped memory for tpu_custom_call.1']
    %16 = vsyncpa [#allocation3], 0
    %17 = vsyncpa [#allocation6], 0
    %18 = vsyncpa [#allocation4], 0
    %19 = vsyncpa [#allocation10], 0
    // Predicated region
    $region2: #{tpu_custom_call.1} parent=1 // pred_check
      _
    $region3: #{tpu_custom_call.1} parent=1 // pred_check_branch
      %21 = sbr.rel (0) target = $region5
    $region4: #{tpu_custom_call.1} parent=1 // pred_region
      _
    $region5: #{tpu_custom_call.1} parent=1 // pred_fallthru
      _
    // Predicated region
    $region6: #{tpu_custom_call.1} parent=1 // pred_check
      _
    $region7: #{tpu_custom_call.1} parent=1 // pred_check_branch
      %23 = sbr.rel (0) target = $region9
    $region8: #{tpu_custom_call.1} parent=1 // pred_region
      %s25 = ssub.s32 128, 128
      %26 = vsyncadd [#allocation3], %s25
      %s28 = sshll.u32 [#allocation2], 4
      %s29 = int_to_ptr.vmem [resolvable:$true] %s28
      %31 = dma.hbm_to_vmem [thread:$0]  %s1, 128, %s29, [#allocation3]
    $region9: #{tpu_custom_call.1} parent=1 // pred_fallthru
      _
    // Predicated region
    $region10: #{tpu_custom_call.1} parent=1 // pred_check
      _
    $region11: #{tpu_custom_call.1} parent=1 // pred_check_branch
      %33 = sbr.rel (0) target = $region13
    $region12: #{tpu_custom_call.1} parent=1 // pred_region
      _
    $region13: #{tpu_custom_call.1} parent=1 // pred_fallthru
      _
    // Predicated region
    $region14: #{tpu_custom_call.1} parent=1 // pred_check
      _
    $region15: #{tpu_custom_call.1} parent=1 // pred_check_branch
      %35 = sbr.rel (0) target = $region17
    $region16: #{tpu_custom_call.1} parent=1 // pred_region
      %s37 = ssub.s32 2048, 2048
      %38 = vsyncadd [#allocation6], %s37
      %s39 = sshll.u32 [#allocation5], 4
      %s40 = int_to_ptr.vmem [resolvable:$true] %s39
      %45 = dma.hbm_to_vmem [thread:$0]  %s3, 2048, %s40, [#allocation6], 128, 128, 8
    $region17: #{tpu_custom_call.1} parent=1 // pred_fallthru
      _
    // Predicated region
    $region18: #{tpu_custom_call.1} parent=1 // pred_check
      _
    $region19: #{tpu_custom_call.1} parent=1 // pred_check_branch
      %47 = sbr.rel (0) target = $region21
    $region20: #{tpu_custom_call.1} parent=1 // pred_region
      _
    $region21: #{tpu_custom_call.1} parent=1 // pred_fallthru
      _
    // Predicated region
    $region22: #{tpu_custom_call.1} parent=1 // pred_check
      _
    $region23: #{tpu_custom_call.1} parent=1 // pred_check_branch
      %49 = sbr.rel (0) target = $region25
    $region24: #{tpu_custom_call.1} parent=1 // pred_region
      _
    $region25: #{tpu_custom_call.1} parent=1 // pred_fallthru
      _
    // Predicated region
    $region26: #{tpu_custom_call.1} parent=1 // pred_check
      _
    $region27: #{tpu_custom_call.1} parent=1 // pred_check_branch
      %51 = sbr.rel (0) target = $region29
    $region28: #{tpu_custom_call.1} parent=1 // pred_region
      _
    $region29: #{tpu_custom_call.1} parent=1 // pred_fallthru
      _
    // Predicated region
    $region30: #{tpu_custom_call.1} parent=1 // pred_check
      _
    $region31: #{tpu_custom_call.1} parent=1 // pred_check_branch
      %53 = sbr.rel (0) target = $region33
    $region32: #{tpu_custom_call.1} parent=1 // pred_region
      %s55 = ssub.s32 2048, 2048
      %56 = vsyncadd [#allocation6], %s55
      %s57 = sshll.u32 [#allocation7], 4
      %s58 = int_to_ptr.vmem [resolvable:$true] %s57
      %63 = dma.hbm_to_vmem [thread:$0]  %s7, 2048, %s58, [#allocation6], 128, 128, 8
    $region33: #{tpu_custom_call.1} parent=1 // pred_fallthru
      _
    // Predicated region
    $region34: #{tpu_custom_call.1} parent=1 // pred_check
      _
    $region35: #{tpu_custom_call.1} parent=1 // pred_check_branch
      %65 = sbr.rel (0) target = $region37
    $region36: #{tpu_custom_call.1} parent=1 // pred_region
      _
    $region37: #{tpu_custom_call.1} parent=1 // pred_fallthru
      _
    // Predicated region
    $region38: #{tpu_custom_call.1} parent=1 // pred_check
      _
    $region39: #{tpu_custom_call.1} parent=1 // pred_check_branch
      %67 = sbr.rel (0) target = $region41
    $region40: #{tpu_custom_call.1} parent=1 // pred_region
      %68 = dma.done [#allocation3], 128
    $region41: #{tpu_custom_call.1} parent=1 // pred_fallthru
      _
    // Predicated region
    $region42: #{tpu_custom_call.1} parent=1 // pred_check
      _
    $region43: #{tpu_custom_call.1} parent=1 // pred_check_branch
      %70 = sbr.rel (0) target = $region45
    $region44: #{tpu_custom_call.1} parent=1 // pred_region
      %71 = dma.done [#allocation6], 2048
    $region45: #{tpu_custom_call.1} parent=1 // pred_fallthru
      _
    // Predicated region
    $region46: #{tpu_custom_call.1} parent=1 // pred_check
      _
    $region47: #{tpu_custom_call.1} parent=1 // pred_check_branch
      %73 = sbr.rel (0) target = $region49
    $region48: #{tpu_custom_call.1} parent=1 // pred_region
      %74 = dma.done [#allocation6], 2048
    $region49: #{tpu_custom_call.1} parent=1 // pred_fallthru
      _
    %v75 = vld [vmem:[%s0] sm:$0xff]
    %v76 = vld [vmem:[#allocation2] sm:$0xff]
    %77 = vxpose.xlu0.b32.start [1/16] %v75, 128
    %78 = vxpose.xlu0.b32.cont [2/16] 0.0, 128
    %79 = vxpose.xlu0.b32.cont [3/16] 0.0, 128
    %80 = vxpose.xlu0.b32.cont [4/16] 0.0, 128
    %81 = vxpose.xlu0.b32.cont [5/16] 0.0, 128
    %82 = vxpose.xlu0.b32.cont [6/16] 0.0, 128
    %83 = vxpose.xlu0.b32.cont [7/16] 0.0, 128
    %84 = vxpose.xlu0.b32.cont [8/16] 0.0, 128
    %85 = vxpose.xlu0.b32.cont [9/16] 0.0, 128
    %86 = vxpose.xlu0.b32.cont [10/16] 0.0, 128
    %87 = vxpose.xlu0.b32.cont [11/16] 0.0, 128
    %88 = vxpose.xlu0.b32.cont [12/16] 0.0, 128
    %89 = vxpose.xlu0.b32.cont [13/16] 0.0, 128
    %90 = vxpose.xlu0.b32.cont [14/16] 0.0, 128
    %91 = vxpose.xlu0.b32.cont [15/16] 0.0, 128
    %92 = vxpose.xlu0.b32.end [16/16] 0.0, 128
    %v93 = vpop.trf.xlu0
    %v94 = vpop.trf.xlu0
    %v95 = vpop.trf.xlu0
    %v96 = vpop.trf.xlu0
    %v97 = vpop.trf.xlu0
    %v98 = vpop.trf.xlu0
    %v99 = vpop.trf.xlu0
    %v100 = vpop.trf.xlu0
    %v101 = vpop.trf.xlu0
    %v102 = vpop.trf.xlu0
    %v103 = vpop.trf.xlu0
    %v104 = vpop.trf.xlu0
    %v105 = vpop.trf.xlu0
    %v106 = vpop.trf.xlu0
    %v107 = vpop.trf.xlu0
    %v108 = vpop.trf.xlu0
    %vm109 = vcmask 64512
    %v111 = vsel %vm109, %v93, 0
    %113 = vmatprep.subr.mxu0 0.0
    %114 = vmatpush1.msra.mxu0 %v76
    %115 = vmatprep.subr.mxu0 0.0
    %116 = vmatpush1.msra.mxu0 0.0
    %117 = vmatprep.subr.mxu0 0.0
    %118 = vmatpush1.msra.mxu0 0.0
    %119 = vmatprep.subr.mxu0 0.0
    %120 = vmatpush1.msra.mxu0 0.0
    %121 = vmatprep.subr.mxu0 0.0
    %122 = vmatpush1.msra.mxu0 0.0
    %123 = vmatprep.subr.mxu0 0.0
    %124 = vmatpush1.msra.mxu0 0.0
    %125 = vmatprep.subr.mxu0 0.0
    %126 = vmatpush1.msra.mxu0 0.0
    %127 = vmatprep.subr.mxu0 0.0
    %128 = vmatpush1.msra.mxu0 0.0
    %129 = vmatprep.subr.mxu0 0.0
    %130 = vmatpush1.msra.mxu0 0.0
    %131 = vmatprep.subr.mxu0 0.0
    %132 = vmatpush1.msra.mxu0 0.0
    %133 = vmatprep.subr.mxu0 0.0
    %134 = vmatpush1.msra.mxu0 0.0
    %135 = vmatprep.subr.mxu0 0.0
    %136 = vmatpush1.msra.mxu0 0.0
    %137 = vmatprep.subr.mxu0 0.0
    %138 = vmatpush1.msra.mxu0 0.0
    %139 = vmatprep.subr.mxu0 0.0
    %140 = vmatpush1.msra.mxu0 0.0
    %141 = vmatprep.subr.mxu0 0.0
    %142 = vmatpush1.msra.mxu0 0.0
    %143 = vmatprep.subr.mxu0 0.0
    %144 = vmatpush1.msra.mxu0 0.0
    %145 = vmatprep.subr.mxu0 0.0
    %146 = vmatpush1.msra.mxu0 0.0
    %147 = vmatprep.subr.mxu0 0.0
    %148 = vmatpush1.msra.mxu0 0.0
    %149 = vmatprep.subr.mxu0 0.0
    %150 = vmatpush1.msra.mxu0 0.0
    %151 = vmatprep.subr.mxu0 0.0
    %152 = vmatpush1.msra.mxu0 0.0
    %153 = vmatprep.subr.mxu0 0.0
    %154 = vmatpush1.msra.mxu0 0.0
    %155 = vmatprep.subr.mxu0 0.0
    %156 = vmatpush1.msra.mxu0 0.0
    %157 = vmatprep.subr.mxu0 0.0
    %158 = vmatpush1.msra.mxu0 0.0
    %159 = vmatprep.subr.mxu0 0.0
    %160 = vmatpush1.msra.mxu0 0.0
    %161 = vmatprep.subr.mxu0 0.0
    %162 = vmatpush1.msra.mxu0 0.0
    %163 = vmatprep.subr.mxu0 0.0
    %164 = vmatpush1.msra.mxu0 0.0
    %165 = vmatprep.subr.mxu0 0.0
    %166 = vmatpush1.msra.mxu0 0.0
    %167 = vmatprep.subr.mxu0 0.0
    %168 = vmatpush1.msra.mxu0 0.0
    %169 = vmatprep.subr.mxu0 0.0
    %170 = vmatpush1.msra.mxu0 0.0
    %171 = vmatprep.subr.mxu0 0.0
    %172 = vmatpush1.msra.mxu0 0.0
    %173 = vmatprep.subr.mxu0 0.0
    %174 = vmatpush1.msra.mxu0 0.0
    %175 = vmatprep.subr.mxu0 0.0
    %176 = vmatpush1.msra.mxu0 0.0
    %177 = vmatprep.mubr.f32.mxu0 0.0
    %178 = vmatmul.mubr.f32.gmra.mrb[0].mxu0 %v111
    %v179 = vpop.f32.mrb[0].mxu0
    %v180 = vadd.f32 0.0, %v179
    %v181 = vpop.f32.mrb[0].mxu0
    %182 = vdwg.mxu0
    %v183 = vld [vmem:[%s2] sm:$0xff]
    %185 = vset.pattern.permute.xlu0 0
    %186 = vperm.xlu0 %185, %v183
    %v187 = vpop.permute.xlu0 %186
    %v189 = vmul.f32 %v180, %v187
    %v191 = vsel %vm109, %v75, 0
    %193 = vmatprep.subr.mxu0 0.0
    %194 = vmatpush1.msra.mxu0 %v189
    %195 = vmatprep.subr.mxu0 0.0
    %196 = vmatpush1.msra.mxu0 0.0
    %197 = vmatprep.subr.mxu0 0.0
    %198 = vmatpush1.msra.mxu0 0.0
    %199 = vmatprep.subr.mxu0 0.0
    %200 = vmatpush1.msra.mxu0 0.0
    %201 = vmatprep.subr.mxu0 0.0
    %202 = vmatpush1.msra.mxu0 0.0
    %203 = vmatprep.subr.mxu0 0.0
    %204 = vmatpush1.msra.mxu0 0.0
    %205 = vmatprep.subr.mxu0 0.0
    %206 = vmatpush1.msra.mxu0 0.0
    %207 = vmatprep.subr.mxu0 0.0
    %208 = vmatpush1.msra.mxu0 0.0
    %209 = vmatprep.subr.mxu0 0.0
    %210 = vmatpush1.msra.mxu0 0.0
    %211 = vmatprep.subr.mxu0 0.0
    %212 = vmatpush1.msra.mxu0 0.0
    %213 = vmatprep.subr.mxu0 0.0
    %214 = vmatpush1.msra.mxu0 0.0
    %215 = vmatprep.subr.mxu0 0.0
    %216 = vmatpush1.msra.mxu0 0.0
    %217 = vmatprep.subr.mxu0 0.0
    %218 = vmatpush1.msra.mxu0 0.0
    %219 = vmatprep.subr.mxu0 0.0
    %220 = vmatpush1.msra.mxu0 0.0
    %221 = vmatprep.subr.mxu0 0.0
    %222 = vmatpush1.msra.mxu0 0.0
    %223 = vmatprep.subr.mxu0 0.0
    %224 = vmatpush1.msra.mxu0 0.0
    %225 = vmatprep.subr.mxu0 0.0
    %226 = vmatpush1.msra.mxu0 0.0
    %227 = vmatprep.subr.mxu0 0.0
    %228 = vmatpush1.msra.mxu0 0.0
    %229 = vmatprep.subr.mxu0 0.0
    %230 = vmatpush1.msra.mxu0 0.0
    %231 = vmatprep.subr.mxu0 0.0
    %232 = vmatpush1.msra.mxu0 0.0
    %233 = vmatprep.subr.mxu0 0.0
    %234 = vmatpush1.msra.mxu0 0.0
    %235 = vmatprep.subr.mxu0 0.0
    %236 = vmatpush1.msra.mxu0 0.0
    %237 = vmatprep.subr.mxu0 0.0
    %238 = vmatpush1.msra.mxu0 0.0
    %239 = vmatprep.subr.mxu0 0.0
    %240 = vmatpush1.msra.mxu0 0.0
    %241 = vmatprep.subr.mxu0 0.0
    %242 = vmatpush1.msra.mxu0 0.0
    %243 = vmatprep.subr.mxu0 0.0
    %244 = vmatpush1.msra.mxu0 0.0
    %245 = vmatprep.subr.mxu0 0.0
    %246 = vmatpush1.msra.mxu0 0.0
    %247 = vmatprep.subr.mxu0 0.0
    %248 = vmatpush1.msra.mxu0 0.0
    %249 = vmatprep.subr.mxu0 0.0
    %250 = vmatpush1.msra.mxu0 0.0
    %251 = vmatprep.subr.mxu0 0.0
    %252 = vmatpush1.msra.mxu0 0.0
    %253 = vmatprep.subr.mxu0 0.0
    %254 = vmatpush1.msra.mxu0 0.0
    %255 = vmatprep.subr.mxu0 0.0
    %256 = vmatpush1.msra.mxu0 0.0
    %257 = vmatprep.mubr.f32.mxu0 0.0
    %258 = vmatmul.mubr.f32.gmra.mrb[0].mxu0 %v191
    %v259 = vpop.f32.mrb[0].mxu0
    %v260 = vadd.f32 0.0, %v259
    %v261 = vpop.f32.mrb[0].mxu0
    %262 = vdwg.mxu0
    %v263 = vld [vmem:[#allocation5] sm:$0xff]
    %v264 = vld [vmem:[#allocation5 + $0x8] sm:$0xff]
    %v265 = vld [vmem:[#allocation5 + $0x10] sm:$0xff]
    %v266 = vld [vmem:[#allocation5 + $0x18] sm:$0xff]
    %v267 = vld [vmem:[#allocation5 + $0x20] sm:$0xff]
    %v268 = vld [vmem:[#allocation5 + $0x28] sm:$0xff]
    %v269 = vld [vmem:[#allocation5 + $0x30] sm:$0xff]
    %v270 = vld [vmem:[#allocation5 + $0x38] sm:$0xff]
    %v271 = vld [vmem:[#allocation5 + $0x40] sm:$0xff]
    %v272 = vld [vmem:[#allocation5 + $0x48] sm:$0xff]
    %v273 = vld [vmem:[#allocation5 + $0x50] sm:$0xff]
    %v274 = vld [vmem:[#allocation5 + $0x58] sm:$0xff]
    %v275 = vld [vmem:[#allocation5 + $0x60] sm:$0xff]
    %v276 = vld [vmem:[#allocation5 + $0x68] sm:$0xff]
    %v277 = vld [vmem:[#allocation5 + $0x70] sm:$0xff]
    %v278 = vld [vmem:[#allocation5 + $0x78] sm:$0xff]
    %v279 = vld [vmem:[%s4] sm:$0x1]
    %v281 = vlaneseq
    %v282 = vshrl.u32 %v281, 7
    %v283 = vsub.s32 0, %v282
    %v284 = vrot.slane %v279, %v283
    %286 = vmatprep.subr.mxu0 0.0
    %287 = vmatpush1.msra.mxu0 %v263
    %288 = vmatprep.subr.mxu0 0.0
    %289 = vmatpush1.msra.mxu0 %v264
    %290 = vmatprep.subr.mxu0 0.0
    %291 = vmatpush1.msra.mxu0 %v265
    %292 = vmatprep.subr.mxu0 0.0
    %293 = vmatpush1.msra.mxu0 %v266
    %294 = vmatprep.subr.mxu0 0.0
    %295 = vmatpush1.msra.mxu0 %v267
    %296 = vmatprep.subr.mxu0 0.0
    %297 = vmatpush1.msra.mxu0 %v268
    %298 = vmatprep.subr.mxu0 0.0
    %299 = vmatpush1.msra.mxu0 %v269
    %300 = vmatprep.subr.mxu0 0.0
    %301 = vmatpush1.msra.mxu0 %v270
    %302 = vmatprep.subr.mxu0 0.0
    %303 = vmatpush1.msra.mxu0 %v271
    %304 = vmatprep.subr.mxu0 0.0
    %305 = vmatpush1.msra.mxu0 %v272
    %306 = vmatprep.subr.mxu0 0.0
    %307 = vmatpush1.msra.mxu0 %v273
    %308 = vmatprep.subr.mxu0 0.0
    %309 = vmatpush1.msra.mxu0 %v274
    %310 = vmatprep.subr.mxu0 0.0
    %311 = vmatpush1.msra.mxu0 %v275
    %312 = vmatprep.subr.mxu0 0.0
    %313 = vmatpush1.msra.mxu0 %v276
    %314 = vmatprep.subr.mxu0 0.0
    %315 = vmatpush1.msra.mxu0 %v277
    %316 = vmatprep.subr.mxu0 0.0
    %317 = vmatpush1.msra.mxu0 %v278
    %318 = vmatprep.subr.mxu0 0.0
    %319 = vmatpush1.msra.mxu0 0.0
    %320 = vmatprep.subr.mxu0 0.0
    %321 = vmatpush1.msra.mxu0 0.0
    %322 = vmatprep.subr.mxu0 0.0
    %323 = vmatpush1.msra.mxu0 0.0
    %324 = vmatprep.subr.mxu0 0.0
    %325 = vmatpush1.msra.mxu0 0.0
    %326 = vmatprep.subr.mxu0 0.0
    %327 = vmatpush1.msra.mxu0 0.0
    %328 = vmatprep.subr.mxu0 0.0
    %329 = vmatpush1.msra.mxu0 0.0
    %330 = vmatprep.subr.mxu0 0.0
    %331 = vmatpush1.msra.mxu0 0.0
    %332 = vmatprep.subr.mxu0 0.0
    %333 = vmatpush1.msra.mxu0 0.0
    %334 = vmatprep.subr.mxu0 0.0
    %335 = vmatpush1.msra.mxu0 0.0
    %336 = vmatprep.subr.mxu0 0.0
    %337 = vmatpush1.msra.mxu0 0.0
    %338 = vmatprep.subr.mxu0 0.0
    %339 = vmatpush1.msra.mxu0 0.0
    %340 = vmatprep.subr.mxu0 0.0
    %341 = vmatpush1.msra.mxu0 0.0
    %342 = vmatprep.subr.mxu0 0.0
    %343 = vmatpush1.msra.mxu0 0.0
    %344 = vmatprep.subr.mxu0 0.0
    %345 = vmatpush1.msra.mxu0 0.0
    %346 = vmatprep.subr.mxu0 0.0
    %347 = vmatpush1.msra.mxu0 0.0
    %348 = vmatprep.subr.mxu0 0.0
    %349 = vmatpush1.msra.mxu0 0.0
    %350 = vmatprep.mubr.f32.mxu0 0.0
    %351 = vmatmul.mubr.f32.gmra.mrb[0].mxu0 %v260
    %v352 = vpop.f32.mrb[0].mxu0
    %v353 = vadd.f32 %v284, %v352
    %v354 = vpop.f32.mrb[0].mxu0
    %355 = vdwg.mxu0
    %356 = vst [vmem:[#allocation9] sm:$0xff] %v353
    %v357 = vld [vmem:[%s5] sm:$0x1]
    %v359 = vlaneseq
    %v360 = vshrl.u32 %v359, 7
    %v361 = vsub.s32 0, %v360
    %v362 = vrot.slane %v357, %v361
    %v364 = vmul.f32 %v353, %v362
    %v365 = vld [vmem:[%s6] sm:$0x1]
    %v367 = vlaneseq
    %v368 = vshrl.u32 %v367, 7
    %v369 = vsub.s32 0, %v368
    %v370 = vrot.slane %v365, %v369
    %v372 = vadd.f32 %v364, %v370
    %v373 = vmax.f32 %v372, 0.0
    %v374 = vld [vmem:[#allocation7] sm:$0xff]
    %v375 = vld [vmem:[#allocation7 + $0x8] sm:$0xff]
    %v376 = vld [vmem:[#allocation7 + $0x10] sm:$0xff]
    %v377 = vld [vmem:[#allocation7 + $0x18] sm:$0xff]
    %v378 = vld [vmem:[#allocation7 + $0x20] sm:$0xff]
    %v379 = vld [vmem:[#allocation7 + $0x28] sm:$0xff]
    %v380 = vld [vmem:[#allocation7 + $0x30] sm:$0xff]
    %v381 = vld [vmem:[#allocation7 + $0x38] sm:$0xff]
    %v382 = vld [vmem:[#allocation7 + $0x40] sm:$0xff]
    %v383 = vld [vmem:[#allocation7 + $0x48] sm:$0xff]
    %v384 = vld [vmem:[#allocation7 + $0x50] sm:$0xff]
    %v385 = vld [vmem:[#allocation7 + $0x58] sm:$0xff]
    %v386 = vld [vmem:[#allocation7 + $0x60] sm:$0xff]
    %v387 = vld [vmem:[#allocation7 + $0x68] sm:$0xff]
    %v388 = vld [vmem:[#allocation7 + $0x70] sm:$0xff]
    %v389 = vld [vmem:[#allocation7 + $0x78] sm:$0xff]
    %v390 = vld [vmem:[%s8] sm:$0x1]
    %v392 = vlaneseq
    %v393 = vshrl.u32 %v392, 7
    %v394 = vsub.s32 0, %v393
    %v395 = vrot.slane %v390, %v394
    %397 = vmatprep.subr.mxu0 0.0
    %398 = vmatpush1.msra.mxu0 %v374
    %399 = vmatprep.subr.mxu0 0.0
    %400 = vmatpush1.msra.mxu0 %v375
    %401 = vmatprep.subr.mxu0 0.0
    %402 = vmatpush1.msra.mxu0 %v376
    %403 = vmatprep.subr.mxu0 0.0
    %404 = vmatpush1.msra.mxu0 %v377
    %405 = vmatprep.subr.mxu0 0.0
    %406 = vmatpush1.msra.mxu0 %v378
    %407 = vmatprep.subr.mxu0 0.0
    %408 = vmatpush1.msra.mxu0 %v379
    %409 = vmatprep.subr.mxu0 0.0
    %410 = vmatpush1.msra.mxu0 %v380
    %411 = vmatprep.subr.mxu0 0.0
    %412 = vmatpush1.msra.mxu0 %v381
    %413 = vmatprep.subr.mxu0 0.0
    %414 = vmatpush1.msra.mxu0 %v382
    %415 = vmatprep.subr.mxu0 0.0
    %416 = vmatpush1.msra.mxu0 %v383
    %417 = vmatprep.subr.mxu0 0.0
    %418 = vmatpush1.msra.mxu0 %v384
    %419 = vmatprep.subr.mxu0 0.0
    %420 = vmatpush1.msra.mxu0 %v385
    %421 = vmatprep.subr.mxu0 0.0
    %422 = vmatpush1.msra.mxu0 %v386
    %423 = vmatprep.subr.mxu0 0.0
    %424 = vmatpush1.msra.mxu0 %v387
    %425 = vmatprep.subr.mxu0 0.0
    %426 = vmatpush1.msra.mxu0 %v388
    %427 = vmatprep.subr.mxu0 0.0
    %428 = vmatpush1.msra.mxu0 %v389
    %429 = vmatprep.subr.mxu0 0.0
    %430 = vmatpush1.msra.mxu0 0.0
    %431 = vmatprep.subr.mxu0 0.0
    %432 = vmatpush1.msra.mxu0 0.0
    %433 = vmatprep.subr.mxu0 0.0
    %434 = vmatpush1.msra.mxu0 0.0
    %435 = vmatprep.subr.mxu0 0.0
    %436 = vmatpush1.msra.mxu0 0.0
    %437 = vmatprep.subr.mxu0 0.0
    %438 = vmatpush1.msra.mxu0 0.0
    %439 = vmatprep.subr.mxu0 0.0
    %440 = vmatpush1.msra.mxu0 0.0
    %441 = vmatprep.subr.mxu0 0.0
    %442 = vmatpush1.msra.mxu0 0.0
    %443 = vmatprep.subr.mxu0 0.0
    %444 = vmatpush1.msra.mxu0 0.0
    %445 = vmatprep.subr.mxu0 0.0
    %446 = vmatpush1.msra.mxu0 0.0
    %447 = vmatprep.subr.mxu0 0.0
    %448 = vmatpush1.msra.mxu0 0.0
    %449 = vmatprep.subr.mxu0 0.0
    %450 = vmatpush1.msra.mxu0 0.0
    %451 = vmatprep.subr.mxu0 0.0
    %452 = vmatpush1.msra.mxu0 0.0
    %453 = vmatprep.subr.mxu0 0.0
    %454 = vmatpush1.msra.mxu0 0.0
    %455 = vmatprep.subr.mxu0 0.0
    %456 = vmatpush1.msra.mxu0 0.0
    %457 = vmatprep.subr.mxu0 0.0
    %458 = vmatpush1.msra.mxu0 0.0
    %459 = vmatprep.subr.mxu0 0.0
    %460 = vmatpush1.msra.mxu0 0.0
    %461 = vmatprep.mubr.f32.mxu0 0.0
    %462 = vmatmul.mubr.f32.gmra.mrb[0].mxu0 %v373
    %v463 = vpop.f32.mrb[0].mxu0
    %v464 = vadd.f32 %v395, %v463
    %v465 = vpop.f32.mrb[0].mxu0
    %466 = vdwg.mxu0
    %467 = vmax.xlane.f32.xlu0 %v464
    %v468 = vpop.xlane.xlu0 %467
    %v469 = vsub.f32 %v464, %v468
    %v470 = vmul.f32 %v469, 1.442695
    %v471 = vpow.pop %v470
    %472 = vadd.xlane.f32.xlu0 %v471
    %v473 = vpop.xlane.xlu0 %472
    %v474 = vlog2.pop %v473
    %v475 = vmul.f32 %v474, 0.6931472
    %v476 = vadd.f32 %v475, %v468
    %v477 = vsub.f32 %v464, %v476
    %478 = vst [vmem:[#allocation8] sm:$0xff] %v477
    // Predicated region
    $region50: #{tpu_custom_call.1} parent=1 // pred_check
      _
    $region51: #{tpu_custom_call.1} parent=1 // pred_check_branch
      %480 = sbr.rel (0) target = $region53
    $region52: #{tpu_custom_call.1} parent=1 // pred_region
      %s482 = ssub.s32 128, 128
      %483 = vsyncadd [#allocation4], %s482
      %s485 = sshll.u32 [#allocation8], 4
      %s486 = int_to_ptr.vmem [resolvable:$true] %s485
      %488 = dma.vmem_to_hbm [thread:$0]  %s486, 128, %s9, [#allocation4]
    $region53: #{tpu_custom_call.1} parent=1 // pred_fallthru
      _
    // Predicated region
    $region54: #{tpu_custom_call.1} parent=1 // pred_check
      _
    $region55: #{tpu_custom_call.1} parent=1 // pred_check_branch
      %490 = sbr.rel (0) target = $region57
    $region56: #{tpu_custom_call.1} parent=1 // pred_region
      %s492 = ssub.s32 128, 128
      %493 = vsyncadd [#allocation10], %s492
      %s495 = sshll.u32 [#allocation9], 4
      %s496 = int_to_ptr.vmem [resolvable:$true] %s495
      %498 = dma.vmem_to_hbm [thread:$0]  %s496, 128, %s10, [#allocation10]
    $region57: #{tpu_custom_call.1} parent=1 // pred_fallthru
      _
    // Predicated region
    $region58: #{tpu_custom_call.1} parent=1 // pred_check
      _
    $region59: #{tpu_custom_call.1} parent=1 // pred_check_branch
      %500 = sbr.rel (0) target = $region61
    $region60: #{tpu_custom_call.1} parent=1 // pred_region
      %501 = dma.done [#allocation4], 128
    $region61: #{tpu_custom_call.1} parent=1 // pred_fallthru
      _
    // Predicated region
    $region62: #{tpu_custom_call.1} parent=1 // pred_check
      _
    $region63: #{tpu_custom_call.1} parent=1 // pred_check_branch
      %503 = sbr.rel (0) target = $region65
    $region64: #{tpu_custom_call.1} parent=1 // pred_region
      %504 = dma.done [#allocation10], 128
    $region65: #{tpu_custom_call.1} parent=1 // pred_fallthru
      _
    %505 = vsyncpa [#allocation3], 1
    %506 = vsyncpa [#allocation6], 1
    %507 = vsyncpa [#allocation4], 1
    %508 = vsyncpa [#allocation10], 1

</llo_original>
